<compile_context>
chip_gen: v7x
topology: tpu7x:2x2x1
jax: 0.10.0
libtpu: 0.0.40
codegen_flags: <defaults>
</compile_context>

<pallas_src>
import jax
import jax.numpy as jnp
from jax.experimental import pallas as pl
from jax.experimental.pallas import tpu as pltpu

IGNORE_INDEX = 255
SMOOTH_CE = 0.05      # SoftCrossEntropyLoss smooth_factor
SMOOTH_DICE = 0.05    # DiceLoss smooth
DICE_EPS = 1e-7       # DiceLoss eps (clamp_min on denominator)

_VMEM_LIMIT = 48 * 1024 * 1024    # <= 48 MiB: fits v7x (64 MiB/TC), fine on v5e/v6e
_VMEM_BUDGET = 16 * 1024 * 1024   # working-set budget used to size the HW tile


def _round_up(x, m):
    return ((x + m - 1) // m) * m


def _pick_tile(C, HW, itemsize):
    """Largest HW tile (multiple of 128) whose live working set stays inside
    _VMEM_BUDGET on every generation.  Live set ~ (x, ez, probs, onehot, two
    products, lse rows) + fused-dot RHS (~5C rows) + 2 double-buffered
    native-dtype input blocks."""
    hw128 = _round_up(HW, 128)
    live_f32_rows = 12.0 + 2.0 * itemsize / 4.0
    t = int(_VMEM_BUDGET / (live_f32_rows * C * 4))
    t = max(128, (t // 128) * 128)
    t = min(t, 32768, hw128)
    return int(t)


# -----------------------------------------------------------------------------
# Kernel factory: label-smoothed CE (+ optional dice) statistics, tiled over HW
# -----------------------------------------------------------------------------
def _make_stats_kernel(C, T, HW, npp, need_dice, fuse_ce, ragged):
    def kernel(logits_ref, targets_ref, out_ref):
        # logits_ref : (C, T) native dtype   targets_ref : (1, T) i32
        # out_ref    : (1, R) f32 accumulator (resident across the HW grid axis)
        @pl.when(pl.program_id(2) == 0)
        def _init():
            out_ref[...] = jnp.zeros_like(out_ref)

        x = logits_ref[...].astype(jnp.float32)            # upcast in VMEM (C, T)
        tgt = targets_ref[...]                             # (1, T) i32
        valid = tgt != IGNORE_INDEX

        if ragged:
            # last HW tile extends past the true array: mask & clamp garbage lanes
            tile_idx = pl.program_id(1) * npp + pl.program_id(2)
            lane = jax.lax.broadcasted_iota(jnp.int32, (1, T), 1)
            in_range = (tile_idx * T + lane) < HW
            valid = jnp.logical_and(valid, in_range)
            x = jnp.where(in_range, x, 0.0)                # BEFORE exp/max (no NaN/inf)

        validf = valid.astype(jnp.float32)                 # (1, T) — becomes dot LHS
        tgt0 = jnp.where(valid, tgt, 0)

        # stable log-softmax pieces over the channel (sublane) axis
        m = jnp.max(x, axis=0, keepdims=True)              # (1, T)
        ez = jnp.exp(x - m)                                # (C, T)
        sez = jnp.sum(ez, axis=0, keepdims=True)           # (1, T)
        lse = m + jnp.log(sez)                             # (1, T) = logsumexp_c(x)

        # unmasked one-hot: the ignore/ragged masking lives in the dot LHS (validf)
        iota_c = jax.lax.broadcasted_iota(jnp.int32, (C, 1), 0)
        onehot = (iota_c == tgt0).astype(jnp.float32)      # (C, T)

        rows = []
        if need_dice:
            inv = 1.0 / sez                                # single (1,T) reciprocal row
            probs = ez * inv                               # softmax(x)       (C, T)
            rows += [probs * onehot, probs, onehot]        # 3C dice rows
        if fuse_ce:
            rows += [x * onehot, x, lse]                   # 2C+1 CE rows (epilogue sums)
        else:
            # class count too large for one 128-wide N tile: reduce on sublane axis
            x_tgt = jnp.sum(x * onehot, axis=0, keepdims=True)
            x_sum = jnp.sum(x, axis=0, keepdims=True)
            rows += [x_tgt, x_sum, lse]                    # 3 CE rows

        rhs = jnp.concatenate(rows, axis=0)                # (R, T)

        # ONE fused MXU reduction: every stat row valid-weighted by the LHS.
        dn = (((1,), (1,)), ((), ()))
        out_ref[...] += jax.lax.dot_general(
            validf, rhs, dn, preferred_element_type=jnp.float32)   # (1, R)

    return kernel


def _run_stats(logits, labels, need_dice):
    """Returns (nll_sum, smooth_sum, inter_c, pred_c, true_c); dice entries are
    None when need_dice=False (aux CE-only pass)."""
    B, C, H, W = logits.shape
    assert C >= 2, "multiclass loss requires at least 2 classes"
    HW = H * W
    T = _pick_tile(C, HW, jnp.dtype(logits.dtype).itemsize)

    NT = -(-HW // T)                       # number of HW tiles
    P = 2 if (NT % 2 == 0) else 1          # split HW tiles across 2 cores (v7x)
    npp = NT // P
    ragged = (NT * T != HW)

    if need_dice:
        fuse_ce = (5 * C + 1) <= 128
        R = (5 * C + 1) if fuse_ce else (3 * C + 3)
    else:
        fuse_ce = (2 * C + 1) <= 128
        R = (2 * C + 1) if fuse_ce else 3

    lg = logits.reshape(B, C, HW)          # native dtype, no pad / no HBM copy
    tg = labels.reshape(B, 1, HW)
    if tg.dtype != jnp.int32:
        tg = tg.astype(jnp.int32)

    kernel = _make_stats_kernel(C, T, HW, npp, need_dice, fuse_ce, ragged)
    out = pl.pallas_call(
        kernel,
        out_shape=jax.ShapeDtypeStruct((B, P, 1, R), jnp.float32),
        grid=(B, P, npp),
        in_specs=[
            pl.BlockSpec((None, C, T), lambda bi, p, hi: (bi, 0, p * npp + hi)),
            pl.BlockSpec((None, 1, T), lambda bi, p, hi: (bi, 0, p * npp + hi)),
        ],
        out_specs=pl.BlockSpec((None, None, 1, R), lambda bi, p, hi: (bi, p, 0, 0)),
        compiler_params=pltpu.CompilerParams(
            dimension_semantics=("parallel", "parallel", "arbitrary"),
            vmem_limit_bytes=_VMEM_LIMIT,
        ),
    )(lg, tg)

    stats = jnp.sum(out, axis=(0, 1))[0]   # reduce (B, P) partials -> (R,)

    if need_dice:
        inter = stats[0:C]
        pred = stats[C:2 * C]
        true = stats[2 * C:3 * C]
        if fuse_ce:
            s1 = jnp.sum(stats[3 * C:4 * C])   # sum_px valid * x[target]
            s2 = jnp.sum(stats[4 * C:5 * C])   # sum_px valid * sum_c x
            s_lse = stats[5 * C]               # sum_px valid * logsumexp
        else:
            s1 = stats[3 * C]
            s2 = stats[3 * C + 1]
            s_lse = stats[3 * C + 2]
    else:
        inter = pred = true = None
        if fuse_ce:
            s1 = jnp.sum(stats[0:C])
            s2 = jnp.sum(stats[C:2 * C])
            s_lse = stats[2 * C]
        else:
            s1 = stats[0]
            s2 = stats[1]
            s_lse = stats[2]

    nll_sum = s_lse - s1                   # sum_px valid * (lse - x[target])
    smooth_sum = C * s_lse - s2            # sum_px valid * (C*lse - sum_c x)
    return nll_sum, smooth_sum, inter, pred, true


# -----------------------------------------------------------------------------
# Loss wrappers (cheap scalar epilogue in plain JAX)
# -----------------------------------------------------------------------------
def soft_cross_entropy_loss(logits, labels):
    """SoftCrossEntropyLoss(smooth_factor=0.05, ignore_index=255), mean reduction.

    Note: the mean divides by B*H*W including ignore_index pixels, matching
    pytorch-toolbelt's label_smoothed_nll_loss (masked_fill then mean)."""
    B, C, H, W = logits.shape
    nll_sum, smooth_sum, _, _, _ = _run_stats(logits, labels, need_dice=False)
    n = B * H * W
    return (1.0 - SMOOTH_CE) * (nll_sum / n) + (SMOOTH_CE / C) * (smooth_sum / n)


def joint_ce_dice_loss(logits, labels):
    """JointLoss(SoftCE(0.05, 255), Dice(multiclass, 0.05, 255), 1.0, 1.0)."""
    B, C, H, W = logits.shape
    nll_sum, smooth_sum, inter_c, pred_c, true_c = _run_stats(logits, labels, need_dice=True)
    n = B * H * W

    # SoftCrossEntropyLoss (label-smoothed NLL, mean over all B*H*W pixels)
    ce_loss = (1.0 - SMOOTH_CE) * (nll_sum / n) + (SMOOTH_CE / C) * (smooth_sum / n)

    # DiceLoss (multiclass, from_logits, dims=(0, 2), smooth=0.05, per-class then mean)
    card_c = pred_c + true_c
    dice_score = (2.0 * inter_c + SMOOTH_DICE) / jnp.maximum(card_c + SMOOTH_DICE, DICE_EPS)
    dice_loss = jnp.mean((1.0 - dice_score) * (true_c > 0).astype(jnp.float32))

    return 1.0 * ce_loss + 1.0 * dice_loss   # JointLoss weights (1.0, 1.0)


def unetformer_loss_forward(logits, labels, aux_logits=None, training=False):
    """UnetFormerLoss.forward.

    eval / single tensor : main_loss(logits, labels)
    training + aux head  : main_loss(logits, labels) + 0.4 * SoftCE(aux_logits, labels)
    """
    main = joint_ce_dice_loss(logits, labels)
    if training and aux_logits is not None:
        return main + 0.4 * soft_cross_entropy_loss(aux_logits, labels)
    return main


if __name__ == "__main__":
    key = jax.random.PRNGKey(0)
    k1, k2, k3 = jax.random.split(key, 3)
    B, C, H, W = 2, 4, 16, 16
    logits = jax.random.normal(k1, (B, C, H, W), dtype=jnp.float32)
    labels = jax.random.randint(k2, (B, H, W), 0, C).astype(jnp.int32)
    # sprinkle a few ignore_index pixels deterministically
    labels = labels.at[0, 0:2, 0:3].set(IGNORE_INDEX)

    # eval / single-logits path: loss = main_loss(logits, labels)
    eval_loss = jax.jit(unetformer_loss_forward)(logits, labels)

    # training path with an auxiliary head: main + 0.4 * aux SoftCE (CE-only kernel)
    aux_logits = jax.random.normal(k3, (B, C, H, W), dtype=jnp.float32)
    train_fn = jax.jit(
        lambda lo, ax, la: unetformer_loss_forward(lo, la, aux_logits=ax, training=True))
    train_loss = train_fn(logits, aux_logits, labels)

    jax.block_until_ready((eval_loss, train_loss))
    print("KERNEL_OK")
</pallas_src>

<mosaic_0001>
module attributes {stable_mosaic.version = 11 : i64} {
  func.func @kernel(%arg0: i32, %arg1: i32, %arg2: i32, %arg3: memref<1x4x256xf32, #tpu.memory_space<vmem>>, %arg4: memref<1x1x256xi32, #tpu.memory_space<vmem>>, %arg5: memref<1x1x1x21xf32, #tpu.memory_space<vmem>>) attributes {dimension_semantics = [#tpu.dimension_semantics<parallel>, #tpu.dimension_semantics<parallel>, #tpu.dimension_semantics<arbitrary>], iteration_bounds = array<i64: 2, 1, 1>, scalar_prefetch = 0 : i64, scratch_operands = 0 : i64, tpu.core_type = #tpu.core_type<tc>, window_params = [{transform_indices = @transform_0, window_bounds = array<i64: 1, 4, 256>}, {transform_indices = @transform_1, window_bounds = array<i64: 1, 1, 256>}, {transform_indices = @transform_2, window_bounds = array<i64: 1, 1, 1, 21>}]} {
    %c0_i32 = arith.constant 0 : i32
    %0 = arith.cmpi eq, %arg2, %c0_i32 : i32
    %1 = arith.extui %0 : i1 to i32
    %c0_i32_0 = arith.constant 0 : i32
    %2 = arith.cmpi ne, %1, %c0_i32_0 : i32
    scf.if %2 {
      %cst_18 = arith.constant 0.000000e+00 : f32
      %42 = vector.broadcast %cst_18 : f32 to vector<1x21xf32>
      %c0_19 = arith.constant 0 : index
      %c0_20 = arith.constant 0 : index
      %c0_21 = arith.constant 0 : index
      %c0_22 = arith.constant 0 : index
      %43 = vector.load %arg5[%c0_19, %c0_20, %c0_21, %c0_22] : memref<1x1x1x21xf32, #tpu.memory_space<vmem>>, vector<1x1x1x21xf32>
      %44 = vector.shape_cast %43 : vector<1x1x1x21xf32> to vector<1x21xf32>
      %45 = vector.shape_cast %42 : vector<1x21xf32> to vector<1x1x1x21xf32>
      tpu.vector_store %arg5[%c0_19, %c0_20, %c0_21, %c0_22], %45 {strides = array<i32>} : memref<1x1x1x21xf32, #tpu.memory_space<vmem>>, vector<1x1x1x21xf32>,
    } else {
    }
    %c0 = arith.constant 0 : index
    %c0_1 = arith.constant 0 : index
    %c0_2 = arith.constant 0 : index
    %3 = vector.load %arg3[%c0, %c0_1, %c0_2] : memref<1x4x256xf32, #tpu.memory_space<vmem>>, vector<1x4x256xf32>
    %4 = vector.shape_cast %3 : vector<1x4x256xf32> to vector<4x256xf32>
    %c0_3 = arith.constant 0 : index
    %c0_4 = arith.constant 0 : index
    %c0_5 = arith.constant 0 : index
    %5 = vector.load %arg4[%c0_3, %c0_4, %c0_5] : memref<1x1x256xi32, #tpu.memory_space<vmem>>, vector<1x1x256xi32>
    %6 = vector.shape_cast %5 : vector<1x1x256xi32> to vector<1x256xi32>
    %c255_i32 = arith.constant 255 : i32
    %7 = vector.broadcast %c255_i32 : i32 to vector<1x256xi32>
    %8 = arith.cmpi ne, %6, %7 : vector<1x256xi32>
    %9 = arith.extui %8 : vector<1x256xi1> to vector<1x256xi32>
    %10 = arith.sitofp %9 : vector<1x256xi32> to vector<1x256xf32>
    %c0_i32_6 = arith.constant 0 : i32
    %11 = vector.broadcast %c0_i32_6 : i32 to vector<1x256xi32>
    %12 = arith.select %8, %6, %11 : vector<1x256xi1>, vector<1x256xi32>
    %cst = arith.constant dense<0xFF800000> : vector<256xf32>
    %13 = vector.multi_reduction <maximumf>, %4, %cst [0] : vector<4x256xf32> to vector<256xf32>
    %14 = vector.shape_cast %13 : vector<256xf32> to vector<1x256xf32>
    %15 = vector.broadcast %14 : vector<1x256xf32> to vector<4x256xf32>
    %16 = arith.subf %4, %15 : vector<4x256xf32>
    %17 = math.exp %16 : vector<4x256xf32>
    %cst_7 = arith.constant dense<0.000000e+00> : vector<256xf32>
    %18 = vector.multi_reduction <add>, %17, %cst_7 [0] : vector<4x256xf32> to vector<256xf32>
    %19 = vector.shape_cast %18 : vector<256xf32> to vector<1x256xf32>
    %20 = math.log %19 : vector<1x256xf32>
    %21 = arith.addf %14, %20 : vector<1x256xf32>
    %22 = tpu.iota {dimensions = array<i32: 0>} : vector<4x1xi32>
    %23 = vector.broadcast %22 : vector<4x1xi32> to vector<4x256xi32>
    %24 = vector.broadcast %12 : vector<1x256xi32> to vector<4x256xi32>
    %25 = arith.cmpi eq, %23, %24 : vector<4x256xi32>
    %26 = arith.extui %25 : vector<4x256xi1> to vector<4x256xi32>
    %27 = arith.sitofp %26 : vector<4x256xi32> to vector<4x256xf32>
    %cst_8 = arith.constant 1.000000e+00 : f32
    %28 = vector.broadcast %cst_8 : f32 to vector<1x256xf32>
    %29 = arith.divf %28, %19 : vector<1x256xf32>
    %30 = vector.broadcast %29 : vector<1x256xf32> to vector<4x256xf32>
    %31 = arith.mulf %17, %30 : vector<4x256xf32>
    %32 = arith.mulf %31, %27 : vector<4x256xf32>
    %33 = arith.mulf %4, %27 : vector<4x256xf32>
    %34 = tpu.concatenate %32, %31, %27, %33, %4, %21 in 0 : vector<4x256xf32>, vector<4x256xf32>, vector<4x256xf32>, vector<4x256xf32>, vector<4x256xf32>, vector<1x256xf32> -> vector<21x256xf32>
    %c0_9 = arith.constant 0 : index
    %c0_10 = arith.constant 0 : index
    %c0_11 = arith.constant 0 : index
    %c0_12 = arith.constant 0 : index
    %35 = vector.load %arg5[%c0_9, %c0_10, %c0_11, %c0_12] : memref<1x1x1x21xf32, #tpu.memory_space<vmem>>, vector<1x1x1x21xf32>
    %36 = vector.shape_cast %35 : vector<1x1x1x21xf32> to vector<1x21xf32>
    %cst_13 = arith.constant dense<0.000000e+00> : vector<1x21xf32>
    %37 = tpu.matmul %10, %34, %cst_13 {dimension_numbers = #tpu.dot_dimension_numbers<[1], [1], [0], [0], [0, 0, 1, 0], [], []>} : vector<1x256xf32>, vector<21x256xf32>, vector<1x21xf32> -> vector<1x21xf32>
    %38 = arith.addf %36, %37 : vector<1x21xf32>
    %c0_14 = arith.constant 0 : index
    %c0_15 = arith.constant 0 : index
    %c0_16 = arith.constant 0 : index
    %c0_17 = arith.constant 0 : index
    %39 = vector.load %arg5[%c0_14, %c0_15, %c0_16, %c0_17] : memref<1x1x1x21xf32, #tpu.memory_space<vmem>>, vector<1x1x1x21xf32>
    %40 = vector.shape_cast %39 : vector<1x1x1x21xf32> to vector<1x21xf32>
    %41 = vector.shape_cast %38 : vector<1x21xf32> to vector<1x1x1x21xf32>
    tpu.vector_store %arg5[%c0_14, %c0_15, %c0_16, %c0_17], %41 {strides = array<i32>} : memref<1x1x1x21xf32, #tpu.memory_space<vmem>>, vector<1x1x1x21xf32>,
    return
  }
  func.func @transform_0(%arg0: i32, %arg1: i32, %arg2: i32) -> (i32, i32, i32) {
    %c1_i32 = arith.constant 1 : i32
    %0 = arith.muli %arg1, %c1_i32 : i32
    %1 = arith.addi %0, %arg2 : i32
    %c0_i32 = arith.constant 0 : i32
    %c0_i32_0 = arith.constant 0 : i32
    return %arg0, %c0_i32, %1 : i32, i32, i32
  }
  func.func @transform_1(%arg0: i32, %arg1: i32, %arg2: i32) -> (i32, i32, i32) {
    %c1_i32 = arith.constant 1 : i32
    %0 = arith.muli %arg1, %c1_i32 : i32
    %1 = arith.addi %0, %arg2 : i32
    %c0_i32 = arith.constant 0 : i32
    %c0_i32_0 = arith.constant 0 : i32
    return %arg0, %c0_i32, %1 : i32, i32, i32
  }
  func.func @transform_2(%arg0: i32, %arg1: i32, %arg2: i32) -> (i32, i32, i32, i32) {
    %c0_i32 = arith.constant 0 : i32
    %c0_i32_0 = arith.constant 0 : i32
    %c0_i32_1 = arith.constant 0 : i32
    return %arg0, %arg1, %c0_i32, %c0_i32_0 : i32, i32, i32, i32
  }
}

</mosaic_0001>

<llo_original>
// kernel: unetformer_loss_forward.1
$region0: #{unetformer_loss_forward.1}
  #allocation0 [shape = 'u32[]', space=smem, size = 0x4, offset = 0x4, fixed_abs, tag = 'smem constant byte address 0x4 - core index']
  #allocation1 [shape = 'u32[144,128]{1,0:T(1,128)}', space=vmem, size = 0x12000, scoped, tag = 'internal scratch']
  %s0 = inlined_call_operand.vmem [shape: f32[2,4,256], index: 0, kind: input, shape index: {}]
  %s1 = inlined_call_operand.vmem [shape: s32[2,1,256], index: 1, kind: input, shape index: {}]
  %s2 = inlined_call_operand.vmem [shape: f32[2,1,1,21], index: 2, kind: output, shape index: {}]
  %s3 = sld [smem:[#allocation0]]
  $region45: #{unetformer_loss_forward.1} parent=0
    _
  %s5 = ssub.s32 1, %s3
  %s6 = scalar_select 0, %s5, %s3
  loop: start=0, step=1, limit=4
  $region2: #{unetformer_loss_forward.1} parent=0 // loop_pre_header
    _
  $region3: #{unetformer_loss_forward.1} parent=0 // loop_header
    %s8 = sphi 0, %s12
    %p9 = scmp.ge.s32.totalorder %s8, 4
    %s15 = sphi 0, %s34
    %s16 = sphi 0, %s30
    %s17 = sphi 0, %s26
    %s18 = sphi 0, %s15
    %s19 = sphi 0, %s16
    %s20 = sphi 0, %s17
    %s21 = sphi 0, %s18
    %s22 = sphi 0, %s19
    %s23 = sphi 0, %s20
    %s41 = sphi 0, %s43
    %s44 = sphi 0, %s41
    %s45 = sphi 0, %s44
    %s61 = sphi 0, %s45
    %s71 = sphi 0, %s73
    %s74 = sphi 0, %s71
    %s75 = sphi 0, %s74
    %s91 = sphi 0, %s75
    %s99 = sphi 0, %s101
    %s102 = sphi 0, %s99
    %s103 = sphi 0, %s102
    %s119 = sphi 0, %s103
  $region4: #{unetformer_loss_forward.1} parent=0 // loop_header_branch
    %11 = sbr.rel (%p9) target = $region8
  $region5: #{unetformer_loss_forward.1} parent=0 // loop_body
    %s13 = ssub.s32 %s8, 1
    %s14 = ssub.s32 %s8, 2
    %s24 = sadd.s32 1, %s17
    %p25 = scmp.ge.s32.totalorder %s24, 1
    %s26 = scalar_select %p25, 0, %s24
    %s27 = sadd.s32 1, %s16
    %s28 = scalar_select %p25, %s27, %s16
    %p29 = scmp.ge.s32.totalorder %s28, 1
    %s30 = scalar_select %p29, 0, %s28
    %s31 = sadd.s32 1, %s15
    %s32 = scalar_select %p29, %s31, %s15
    %p33 = scmp.ge.s32.totalorder %s32, 2
    %s34 = scalar_select %p33, 0, %s32
    %s35 = sadd.s32 %s16, %s17
    %s36 = sadd.s32 %s30, %s26
    %s37 = ssub.s32 %s15, %s34
    %s38 = ssub.s32 %s35, %s36
    %s39 = sor.u32 %s37, %s38
    %p40 = scmp.eq.s32.totalorder %s39, 0
    %s42 = sadd.s32 %s41, 1
    %s43 = scalar_select %p40, %s41, %s42
    %p46 = pneg %p40
    %p47 = scmp.eq.s32.totalorder %s8, 1
    %p48 = por %p46, %p47
    %p49 = scmp.ne.s32.totalorder %s41, %s44
    %p50 = scmp.eq.s32.totalorder %s8, 0
    %p51 = por %p49, %p50
    %p52 = scmp.ne.s32.totalorder %s41, %s44
    %p53 = scmp.eq.s32.totalorder %s13, 1
    %p54 = por %p52, %p53
    %p55 = scmp.ne.s32.totalorder %s44, %s45
    %p56 = scmp.eq.s32.totalorder %s13, 0
    %p57 = por %p55, %p56
    %p58 = scmp.ne.s32.totalorder %s44, %s45
    %p59 = scmp.eq.s32.totalorder %s14, 1
    %p60 = por %p58, %p59
    %p62 = scmp.ne.s32.totalorder %s45, %s61
    %p63 = scmp.eq.s32.totalorder %s14, 0
    %p64 = por %p62, %p63
    %s65 = sadd.s32 %s16, %s17
    %s66 = sadd.s32 %s30, %s26
    %s67 = ssub.s32 %s15, %s34
    %s68 = ssub.s32 %s65, %s66
    %s69 = sor.u32 %s67, %s68
    %p70 = scmp.eq.s32.totalorder %s69, 0
    %s72 = sadd.s32 %s71, 1
    %s73 = scalar_select %p70, %s71, %s72
    %p76 = pneg %p70
    %p77 = scmp.eq.s32.totalorder %s8, 1
    %p78 = por %p76, %p77
    %p79 = scmp.ne.s32.totalorder %s71, %s74
    %p80 = scmp.eq.s32.totalorder %s8, 0
    %p81 = por %p79, %p80
    %p82 = scmp.ne.s32.totalorder %s71, %s74
    %p83 = scmp.eq.s32.totalorder %s13, 1
    %p84 = por %p82, %p83
    %p85 = scmp.ne.s32.totalorder %s74, %s75
    %p86 = scmp.eq.s32.totalorder %s13, 0
    %p87 = por %p85, %p86
    %p88 = scmp.ne.s32.totalorder %s74, %s75
    %p89 = scmp.eq.s32.totalorder %s14, 1
    %p90 = por %p88, %p89
    %p92 = scmp.ne.s32.totalorder %s75, %s91
    %p93 = scmp.eq.s32.totalorder %s14, 0
    %p94 = por %p92, %p93
    %s95 = ssub.s32 %s15, %s34
    %s96 = ssub.s32 %s16, %s30
    %s97 = sor.u32 %s95, %s96
    %p98 = scmp.eq.s32.totalorder %s97, 0
    %s100 = sadd.s32 %s99, 1
    %s101 = scalar_select %p98, %s99, %s100
    %p104 = pneg %p98
    %p105 = scmp.eq.s32.totalorder %s8, 1
    %p106 = por %p104, %p105
    %p107 = scmp.ne.s32.totalorder %s99, %s102
    %p108 = scmp.eq.s32.totalorder %s8, 0
    %p109 = por %p107, %p108
    %p110 = scmp.ne.s32.totalorder %s99, %s102
    %p111 = scmp.eq.s32.totalorder %s13, 1
    %p112 = por %p110, %p111
    %p113 = scmp.ne.s32.totalorder %s102, %s103
    %p114 = scmp.eq.s32.totalorder %s13, 0
    %p115 = por %p113, %p114
    %p116 = scmp.ne.s32.totalorder %s102, %s103
    %p117 = scmp.eq.s32.totalorder %s14, 1
    %p118 = por %p116, %p117
    %p120 = scmp.ne.s32.totalorder %s103, %s119
    %p121 = scmp.eq.s32.totalorder %s14, 0
    %p122 = por %p120, %p121
    %p123 = scmp.le.s32.totalorder 1, %s8
    %p124 = scmp.lt.s32.totalorder %s8, 3
    %p125 = pnand %p123, %p124
    %p126 = pneg %p125
    // Predicated region
    $region9: #{unetformer_loss_forward.1} parent=5 // pred_check
      _
    $region10: #{unetformer_loss_forward.1} parent=5 // pred_check_branch
      %128 = sbr.rel (%p125) target = $region12
    $region11: #{unetformer_loss_forward.1} parent=5 // pred_region
      %s129 = ssub.s32 %s8, 1
    $region12: #{unetformer_loss_forward.1} parent=5 // pred_fallthru
      _
    %p130 = scmp.lt.s32.totalorder %s8, 2
    // Predicated region
    $region13: #{unetformer_loss_forward.1} parent=5 // pred_check
      %p131 = pneg %p130
    $region14: #{unetformer_loss_forward.1} parent=5 // pred_check_branch
      %133 = sbr.rel (%p131) target = $region16
    $region15: #{unetformer_loss_forward.1} parent=5 // pred_region
      // Predicated region
      $region17: #{unetformer_loss_forward.1} parent=15 // pred_check
        %p134 = pneg %p51
      $region18: #{unetformer_loss_forward.1} parent=15 // pred_check_branch
        %136 = sbr.rel (%p134) target = $region20
      $region19: #{unetformer_loss_forward.1} parent=15 // pred_region
        %s137 = sadd.s32 %s16, %s17
        %s138 = smul.u32 2, %s137
        %p139 = scmp.lt.s32.totalorder %s15, 1
        %s140 = scalar_select %p139, %s15, 1
        %p141 = scmp.lt.s32.totalorder %s138, 1
        %s142 = scalar_select %p141, %s138, 1
        %s143 = smul.addr %s140, 2
        %s144 = sadd.s32 %s142, %s143
        %s145 = smul.addr %s144, 4
        %s146 = scalar_lea.vmem %s0, %s145
        %s147 = sadd.s32 %s16, %s17
        %s148 = smul.u32 2, %s147
      $region20: #{unetformer_loss_forward.1} parent=15 // pred_fallthru
        _
      // Predicated region
      $region21: #{unetformer_loss_forward.1} parent=15 // pred_check
        %p149 = pneg %p81
      $region22: #{unetformer_loss_forward.1} parent=15 // pred_check_branch
        %151 = sbr.rel (%p149) target = $region24
      $region23: #{unetformer_loss_forward.1} parent=15 // pred_region
        %s152 = sadd.s32 %s16, %s17
        %s153 = smul.u32 2, %s152
        %p154 = scmp.lt.s32.totalorder %s15, 1
        %s155 = scalar_select %p154, %s15, 1
        %p156 = scmp.lt.s32.totalorder %s153, 1
        %s157 = scalar_select %p156, %s153, 1
        %s158 = smul.addr %s155, 2
        %s159 = sadd.s32 %s157, %s158
        %s160 = scalar_lea.vmem %s1, %s159
        %s161 = sadd.s32 %s16, %s17
        %s162 = smul.u32 2, %s161
      $region24: #{unetformer_loss_forward.1} parent=15 // pred_fallthru
        _
    $region16: #{unetformer_loss_forward.1} parent=5 // pred_fallthru
      _
    %p163 = scmp.le.s32.totalorder 1, %s8
    %p164 = scmp.lt.s32.totalorder %s8, 3
    %p165 = pnand %p163, %p164
    %p166 = pneg %p165
    // Predicated region
    $region25: #{unetformer_loss_forward.1} parent=5 // pred_check
      _
    $region26: #{unetformer_loss_forward.1} parent=5 // pred_check_branch
      %168 = sbr.rel (%p165) target = $region28
    $region27: #{unetformer_loss_forward.1} parent=5 // pred_region
      %s169 = ssub.s32 %s8, 1
      %s170 = sadd.s32 %s19, %s20
      %s171 = smul.u32 2, %s170
      %p172 = scmp.lt.s32.totalorder %s18, 1
      %s173 = scalar_select %p172, %s18, 1
      %p174 = scmp.lt.s32.totalorder %s171, 1
      %s175 = scalar_select %p174, %s171, 1
      %s176 = smul.addr %s173, 2
      %s177 = sadd.s32 %s175, %s176
      %s178 = smul.addr %s177, 4
      %s179 = scalar_lea.vmem %s0, %s178
      %p180 = pneg %p57
      %p181 = pneg %p54
      %s182 = sadd.s32 %s19, %s20
      %s183 = smul.u32 2, %s182
      %p184 = scmp.lt.s32.totalorder %s18, 1
      %s185 = scalar_select %p184, %s18, 1
      %p186 = scmp.lt.s32.totalorder %s183, 1
      %s187 = scalar_select %p186, %s183, 1
      %s188 = smul.addr %s185, 2
      %s189 = sadd.s32 %s187, %s188
      %s190 = scalar_lea.vmem %s1, %s189
      %p191 = pneg %p87
      %p192 = pneg %p84
      %p193 = pneg %p115
      %p194 = pneg %p112
      %p195 = scmp.lt.s32.totalorder %s18, 1
      %s196 = scalar_select %p195, %s18, 1
      %p197 = scmp.lt.s32.totalorder %s19, 0
      %s198 = scalar_select %p197, %s19, 0
      %s199 = sadd.s32 %s198, %s196
      %s200 = scalar_lea.vmem %s2, %s199
      %s201 = sadd.s32 %s19, %s20
      %s202 = smul.u32 2, %s201
      %p203 = scmp.lt.s32.totalorder %s18, 1
      %s204 = scalar_select %p203, %s18, 1
      %p205 = scmp.lt.s32.totalorder %s202, 1
      %s206 = scalar_select %p205, %s202, 1
      %s207 = smul.addr %s204, 2
      %s208 = sadd.s32 %s206, %s207
      %s209 = smul.addr %s208, 4
      %s210 = scalar_lea.vmem %s0, %s209
      %s211 = sadd.s32 %s19, %s20
      %s212 = smul.u32 2, %s211
      %s213 = sadd.s32 %s19, %s20
      %s214 = smul.u32 2, %s213
      %p215 = scmp.lt.s32.totalorder %s18, 1
      %s216 = scalar_select %p215, %s18, 1
      %p217 = scmp.lt.s32.totalorder %s214, 1
      %s218 = scalar_select %p217, %s214, 1
      %s219 = smul.addr %s216, 2
      %s220 = sadd.s32 %s218, %s219
      %s221 = scalar_lea.vmem %s1, %s220
      %s222 = sadd.s32 %s19, %s20
      %s223 = smul.u32 2, %s222
      %p224 = scmp.lt.s32.totalorder %s18, 1
      %s225 = scalar_select %p224, %s18, 1
      %p226 = scmp.lt.s32.totalorder %s19, 0
      %s227 = scalar_select %p226, %s19, 0
      %s228 = sadd.s32 %s227, %s225
      %s229 = scalar_lea.vmem %s2, %s228
      %p230 = scmp.eq.s32.totalorder %s20, 0
      // Predicated region
      $region29: #{unetformer_loss_forward.1} parent=27 // pred_check
        %p231 = pneg %p230
      $region30: #{unetformer_loss_forward.1} parent=27 // pred_check_branch
        %233 = sbr.rel (%p231) target = $region32
      $region31: #{unetformer_loss_forward.1} parent=27 // pred_region
        %vm234 = vcmask 163840
        %235 = vst.msk [vmem:[%s229] sm:$0x1] %vm234, 0.0
      $region32: #{unetformer_loss_forward.1} parent=27 // pred_fallthru
        _
      %v236 = vld [vmem:[%s210] sm:$0xff]
      %v237 = vld [vmem:[%s221] sm:$0x3]
      %vm238 = vcmp.ne.s32.totalorder %v237, 255
      %v239 = vsel %vm238, 1, 0
      %v240 = vcvt.s32.f32 %v239
      %v241 = vsel %vm238, %v237, 0
      %v243 = vcombine.high %v236, %v236
      %vm245 = vcmask 1043456
      %v246 = vsel %vm245, %v236, -inf
      %v247 = vrot.slane %v246, 4
      %v248 = vmax.f32 %v246, %v247
      %v249 = vrot.slane %v248, 2
      %v250 = vmax.f32 %v248, %v249
      %v251 = vrot.slane %v250, 1
      %v252 = vmax.f32 %v250, %v251
      %v253 = vsel %vm245, %v243, -inf
      %v254 = vrot.slane %v253, 4
      %v255 = vmax.f32 %v253, %v254
      %v256 = vrot.slane %v255, 2
      %v257 = vmax.f32 %v255, %v256
      %v258 = vrot.slane %v257, 1
      %v259 = vmax.f32 %v257, %v258
      %v262 = vcombine.low %v252, %v259
      %v264 = vsub.f32 %v236, %v262
      %v265 = vmul.f32 %v264, 1.442695
      %v266 = vpow.pop %v265
      %v268 = vcombine.high %v266, %v266
      %v270 = vsel %vm245, %v266, 0.0
      %v271 = vrot.slane %v270, 4
      %v272 = vadd.f32 %v270, %v271
      %v273 = vrot.slane %v272, 2
      %v274 = vadd.f32 %v272, %v273
      %v275 = vrot.slane %v274, 1
      %v276 = vadd.f32 %v274, %v275
      %v277 = vsel %vm245, %v268, 0.0
      %v278 = vrot.slane %v277, 4
      %v279 = vadd.f32 %v277, %v278
      %v280 = vrot.slane %v279, 2
      %v281 = vadd.f32 %v279, %v280
      %v282 = vrot.slane %v281, 1
      %v283 = vadd.f32 %v281, %v282
      %v284 = vlog2.pop %v276
      %v285 = vmul.f32 %v284, 0.6931472
      %v286 = vlog2.pop %v283
      %v287 = vmul.f32 %v286, 0.6931472
      %v288 = vadd.f32 %v252, %v285
      %v289 = vadd.f32 %v259, %v287
      %v290 = vlaneseq
      %v291 = vshrl.u32 %v290, 7
      %v292 = vlaneseq
      %v293 = vshrl.u32 %v292, 7
      %v294 = vsub.s32 0, %v293
      %v295 = vrot.slane %v241, %v294
      %v296 = vlaneseq
      %v297 = vshrl.u32 %v296, 7
      %v298 = vsub.s32 1, %v297
      %v299 = vrot.slane %v241, %v298
      %vm300 = vcmp.eq.s32.totalorder %v291, %v295
      %vm301 = vcmp.eq.s32.totalorder %v291, %v299
      %v302 = vsel %vm300, 1, 0
      %v303 = vsel %vm301, 1, 0
      %v304 = vcvt.s32.f32 %v302
      %v305 = vcvt.s32.f32 %v303
      %v306 = vrcp.pop %v276
      %v307 = vmul.f32 1.0, %v306
      %v308 = vrcp.pop %v283
      %v309 = vmul.f32 1.0, %v308
      %v312 = vcombine.low %v307, %v309
      %v314 = vmul.f32 %v266, %v312
      %v317 = vcombine.low %v304, %v305
      %v319 = vmul.f32 %v314, %v317
      %v320 = vmul.f32 %v236, %v317
      %v322 = vcombine.high %v319, %v319
      %v325 = vcombine.low %v314, %v314
      %v328 = vcombine.low %v320, %v320
      %v330 = vsel %vm245, %v319, %v325
      %v331 = vsel %vm245, %v322, %v314
      %v332 = vsel %vm245, %v304, %v328
      %v333 = vsel %vm245, %v305, %v320
      %v334 = vsel %vm245, %v236, %v288
      %v335 = vsel %vm245, %v243, %v289
      %v336 = vld [vmem:[%s229] sm:$0x1]
      %v338 = vlaneseq
      %v339 = vshrl.u32 %v338, 7
      %v340 = vsub.s32 0, %v339
      %v341 = vrot.slane %v240, %v340
      %v342 = vlaneseq
      %v343 = vshrl.u32 %v342, 7
      %v344 = vsub.s32 1, %v343
      %v345 = vrot.slane %v240, %v344
      %348 = vmatprep.subr.mxu0 %v331
      %349 = vmatpush1.xpose.msra.mxu0 %v330
      %350 = vmatprep.subr.mxu0 %v333
      %351 = vmatpush1.xpose.msra.mxu0 %v332
      %352 = vmatprep.subr.mxu0 %v335
      %353 = vmatpush1.xpose.msra.mxu0 %v334
      %354 = vmatprep.subr.mxu0 0.0
      %355 = vmatpush1.xpose.msra.mxu0 0.0
      %356 = vmatprep.subr.mxu0 0.0
      %357 = vmatpush1.xpose.msra.mxu0 0.0
      %358 = vmatprep.subr.mxu0 0.0
      %359 = vmatpush1.xpose.msra.mxu0 0.0
      %360 = vmatprep.subr.mxu0 0.0
      %361 = vmatpush1.xpose.msra.mxu0 0.0
      %362 = vmatprep.subr.mxu0 0.0
      %363 = vmatpush1.xpose.msra.mxu0 0.0
      %364 = vmatprep.subr.mxu0 0.0
      %365 = vmatpush1.xpose.msra.mxu0 0.0
      %366 = vmatprep.subr.mxu0 0.0
      %367 = vmatpush1.xpose.msra.mxu0 0.0
      %368 = vmatprep.subr.mxu0 0.0
      %369 = vmatpush1.xpose.msra.mxu0 0.0
      %370 = vmatprep.subr.mxu0 0.0
      %371 = vmatpush1.xpose.msra.mxu0 0.0
      %372 = vmatprep.subr.mxu0 0.0
      %373 = vmatpush1.xpose.msra.mxu0 0.0
      %374 = vmatprep.subr.mxu0 0.0
      %375 = vmatpush1.xpose.msra.mxu0 0.0
      %376 = vmatprep.subr.mxu0 0.0
      %377 = vmatpush1.xpose.msra.mxu0 0.0
      %378 = vmatprep.subr.mxu0 0.0
      %379 = vmatpush1.xpose.msra.mxu0 0.0
      %380 = vmatprep.subr.mxu0 0.0
      %381 = vmatpush1.xpose.msra.mxu0 0.0
      %382 = vmatprep.subr.mxu0 0.0
      %383 = vmatpush1.xpose.msra.mxu0 0.0
      %384 = vmatprep.subr.mxu0 0.0
      %385 = vmatpush1.xpose.msra.mxu0 0.0
      %386 = vmatprep.subr.mxu0 0.0
      %387 = vmatpush1.xpose.msra.mxu0 0.0
      %388 = vmatprep.subr.mxu0 0.0
      %389 = vmatpush1.xpose.msra.mxu0 0.0
      %390 = vmatprep.subr.mxu0 0.0
      %391 = vmatpush1.xpose.msra.mxu0 0.0
      %392 = vmatprep.subr.mxu0 0.0
      %393 = vmatpush1.xpose.msra.mxu0 0.0
      %394 = vmatprep.subr.mxu0 0.0
      %395 = vmatpush1.xpose.msra.mxu0 0.0
      %396 = vmatprep.subr.mxu0 0.0
      %397 = vmatpush1.xpose.msra.mxu0 0.0
      %398 = vmatprep.subr.mxu0 0.0
      %399 = vmatpush1.xpose.msra.mxu0 0.0
      %400 = vmatprep.subr.mxu0 0.0
      %401 = vmatpush1.xpose.msra.mxu0 0.0
      %402 = vmatprep.subr.mxu0 0.0
      %403 = vmatpush1.xpose.msra.mxu0 0.0
      %404 = vmatprep.subr.mxu0 0.0
      %405 = vmatpush1.xpose.msra.mxu0 0.0
      %406 = vmatprep.subr.mxu0 0.0
      %407 = vmatpush1.xpose.msra.mxu0 0.0
      %408 = vmatprep.subr.mxu0 0.0
      %409 = vmatpush1.xpose.msra.mxu0 0.0
      %410 = vmatprep.subr.mxu0 0.0
      %411 = vmatpush1.xpose.msra.mxu0 0.0
      %412 = vmatprep.mubr.f32.mxu0 %v345
      %413 = vmatmul.mubr.f32.gmra.mrb[0].mxu0 %v341
      %v414 = vpop.f32.mrb[0].mxu0
      %v415 = vadd.f32 0.0, %v414
      %v416 = vpop.f32.mrb[0].mxu0
      %417 = vdwg.mxu0
      %v418 = vadd.f32 %v336, %v415
      %vm419 = vcmask 163840
      %420 = vst.msk [vmem:[%s229] sm:$0x1] %vm419, %v418
      %p421 = scmp.lt.s32.totalorder %s18, 1
      %s422 = scalar_select %p421, %s18, 1
      %p423 = scmp.lt.s32.totalorder %s19, 0
      %s424 = scalar_select %p423, %s19, 0
      %s425 = sadd.s32 %s424, %s422
      %s426 = scalar_lea.vmem %s2, %s425
      // Predicated region
      $region33: #{unetformer_loss_forward.1} parent=27 // pred_check
        %p427 = pneg %p112
      $region34: #{unetformer_loss_forward.1} parent=27 // pred_check_branch
        %429 = sbr.rel (%p427) target = $region36
      $region35: #{unetformer_loss_forward.1} parent=27 // pred_region
        _
      $region36: #{unetformer_loss_forward.1} parent=27 // pred_fallthru
        _
    $region28: #{unetformer_loss_forward.1} parent=5 // pred_fallthru
      _
    %p430 = scmp.le.s32.totalorder 2, %s8
    // Predicated region
    $region37: #{unetformer_loss_forward.1} parent=5 // pred_check
      %p431 = pneg %p430
    $region38: #{unetformer_loss_forward.1} parent=5 // pred_check_branch
      %433 = sbr.rel (%p431) target = $region40
    $region39: #{unetformer_loss_forward.1} parent=5 // pred_region
      %s434 = ssub.s32 %s8, 2
      // Predicated region
      $region41: #{unetformer_loss_forward.1} parent=39 // pred_check
        %p435 = pneg %p118
      $region42: #{unetformer_loss_forward.1} parent=39 // pred_check_branch
        %437 = sbr.rel (%p435) target = $region44
      $region43: #{unetformer_loss_forward.1} parent=39 // pred_region
        %p438 = scmp.lt.s32.totalorder %s21, 1
        %s439 = scalar_select %p438, %s21, 1
        %p440 = scmp.lt.s32.totalorder %s22, 0
        %s441 = scalar_select %p440, %s22, 0
        %s442 = sadd.s32 %s441, %s439
        %s443 = scalar_lea.vmem %s2, %s442
      $region44: #{unetformer_loss_forward.1} parent=39 // pred_fallthru
        _
    $region40: #{unetformer_loss_forward.1} parent=5 // pred_fallthru
      _
  $region6: #{unetformer_loss_forward.1} parent=0 // loop_footer
    %s12 = sadd.s32 1, %s8
  $region7: #{unetformer_loss_forward.1} parent=0 // loop_footer_branch
    %7 = sbr.rel target = $region3
  $region8: #{unetformer_loss_forward.1} parent=0 // loop_exit
    _

</llo_original>
